<compile_context>
chip_gen: v5e
topology: v5e:2x2
jax: 0.10.0
libtpu: 0.0.40
codegen_flags: <defaults>
</compile_context>

<pallas_src>
import jax
import jax.numpy as jnp
from jax.experimental import pallas as pl
from jax.experimental.pallas import tpu as pltpu


# ---------------------------------------------------------------------------
# Kernel: out = cat(x, y) @ W_out^T + b_out ; aux = cat(x, y) @ W_aux^T + b_aux
# ---------------------------------------------------------------------------
def _fusion_kernel(x_ref, y_ref, wo_ref, wa_ref, bo_ref, ba_ref, out_ref, aux_ref):
    # (tm, half) ++ (tm, half) -> (tm, 2*half): fuses torch.cat; one K=2*half
    # contraction per head (fills the 256-deep MXU on v6e/v7x).
    xy = jnp.concatenate([x_ref[...], y_ref[...]], axis=-1)
    out = jnp.dot(xy, wo_ref[...], preferred_element_type=jnp.float32) + bo_ref[...]
    aux = jnp.dot(xy, wa_ref[...], preferred_element_type=jnp.float32) + ba_ref[...]
    out_ref[...] = out.astype(out_ref.dtype)
    aux_ref[...] = aux.astype(aux_ref.dtype)


# ---------------------------------------------------------------------------
# One-time parameter preparation (outside the hot forward path)
# ---------------------------------------------------------------------------
def prepare_concat_fusion_params(w_out, b_out, w_aux, b_aux, param_dtype=jnp.bfloat16):
    """Pre-transpose nn.Linear weights to (input_dim, output_dim) and pick the
    streaming dtype (bf16 recommended). Biases stay f32 (added to the f32 acc)."""
    O, D = w_out.shape
    assert w_aux.shape == (O, D) and b_out.shape == (O,) and b_aux.shape == (O,)
    assert D % 2 == 0, "input_dim must be even (concat of two equal halves)"
    return dict(
        w_out=jnp.asarray(w_out).T.astype(param_dtype),   # (D, O)
        w_aux=jnp.asarray(w_aux).T.astype(param_dtype),   # (D, O)
        b_out=jnp.asarray(b_out, jnp.float32).reshape(1, O),
        b_aux=jnp.asarray(b_aux, jnp.float32).reshape(1, O),
    )


# ---------------------------------------------------------------------------
# Tile-size / VMEM budgeting
# ---------------------------------------------------------------------------
def _vmem_capacity_bytes():
    try:
        return int(pltpu.get_tpu_info().vmem_capacity_bytes)
    except Exception:
        return 64 << 20  # conservative: v7x per-TensorCore VMEM


def _pick_tm(batch, bytes_per_row, stream_budget):
    """Largest 8-aligned batch tile whose double-buffered streamed footprint fits
    `stream_budget`; prefer an even grid-step count (v7x: 2 TCs) and a tile that
    divides the batch (no ragged last step)."""
    max_tm = stream_budget // (2 * max(bytes_per_row, 1))  # x2: double-buffered
    tm_cap = max(8, min(1024, (int(max_tm) // 8) * 8))
    if batch <= tm_cap:
        return batch                       # single step (fine on 1-TC v5e/v6e)
    for cand in range(tm_cap, 7, -8):      # divides batch AND even step count
        if batch % cand == 0 and (batch // cand) % 2 == 0:
            return cand
    for cand in range(tm_cap, 7, -8):      # at least divides batch
        if batch % cand == 0:
            return cand
    return tm_cap                          # ragged last step (masked writeback)


# ---------------------------------------------------------------------------
# Forward
# ---------------------------------------------------------------------------
@jax.jit
def _fused_forward(x, y, w_out, w_aux, b_out, b_aux):
    B, half = x.shape
    assert y.shape == (B, half) and y.dtype == x.dtype
    D, O = w_out.shape
    assert D == 2 * half and w_aux.shape == (D, O)
    assert b_out.shape == (1, O) and b_aux.shape == (1, O)

    # Stream in the activation dtype; accumulate in f32 on the MXU.
    w_out = w_out.astype(x.dtype)
    w_aux = w_aux.astype(x.dtype)
    act_bytes = jnp.dtype(x.dtype).itemsize

    # Honest VMEM budget: resident (double-buffered) weights + f32 biases are
    # subtracted from the streaming budget; the rest goes to x/y/out/aux tiles.
    vmem_cap = _vmem_capacity_bytes()
    budget = (vmem_cap * 3) // 4
    resident = 2 * (2 * D * O * act_bytes) + 2 * (2 * O * 4)
    # TODO(synk): add a K-tiled "arbitrary" grid axis with an f32 accumulator
    # scratch if resident weights ever exceed the budget (not needed at this
    # module's default sizes: D=1024, O=100 -> ~0.4 MiB in bf16).
    stream_row = (2 * half + 2 * O) * act_bytes
    tm = _pick_tm(B, stream_row, max(budget - resident, 2 << 20))
    grid = (pl.cdiv(B, tm),)

    needed = resident + 2 * tm * stream_row + (2 << 20)
    vmem_limit = int(min(max(2 * needed, 16 << 20), max(budget, needed)))

    cost = pl.CostEstimate(
        flops=2 * B * D * (2 * O) + 2 * B * O,
        transcendentals=0,
        bytes_accessed=B * stream_row + 2 * D * O * act_bytes + 2 * O * 4,
    )

    out, aux = pl.pallas_call(
        _fusion_kernel,
        out_shape=(jax.ShapeDtypeStruct((B, O), x.dtype),
                   jax.ShapeDtypeStruct((B, O), x.dtype)),
        grid=grid,
        in_specs=[
            pl.BlockSpec((tm, half), lambda i: (i, 0)),   # x tile (streamed)
            pl.BlockSpec((tm, half), lambda i: (i, 0)),   # y tile (streamed)
            pl.BlockSpec((D, O), lambda i: (0, 0)),       # W_out^T (VMEM-resident)
            pl.BlockSpec((D, O), lambda i: (0, 0)),       # W_aux^T (VMEM-resident)
            pl.BlockSpec((1, O), lambda i: (0, 0)),       # b_out  (resident, f32)
            pl.BlockSpec((1, O), lambda i: (0, 0)),       # b_aux  (resident, f32)
        ],
        out_specs=(pl.BlockSpec((tm, O), lambda i: (i, 0)),
                   pl.BlockSpec((tm, O), lambda i: (i, 0))),
        compiler_params=pltpu.CompilerParams(
            dimension_semantics=("parallel",),
            vmem_limit_bytes=vmem_limit,
        ),
        cost_estimate=cost,
    )(x, y, w_out, w_aux, b_out, b_aux)
    return out, aux


def concat_fusion_vanilla_forward(x, y, params):
    """Mirrors ConcatFusion_Vanilla.forward: returns (x, y, out, auxi_out)."""
    out, aux = _fused_forward(x, y, params["w_out"], params["w_aux"],
                              params["b_out"], params["b_aux"])
    return x, y, out, aux


# ---------------------------------------------------------------------------
# Demo / self-test
# ---------------------------------------------------------------------------
def _init_linear(key, out_dim, in_dim):
    """Deterministic nn.Linear-style init: U(-1/sqrt(in), 1/sqrt(in))."""
    kw, kb = jax.random.split(key)
    bound = 1.0 / (in_dim ** 0.5)
    w = jax.random.uniform(kw, (out_dim, in_dim), jnp.float32, -bound, bound)
    b = jax.random.uniform(kb, (out_dim,), jnp.float32, -bound, bound)
    return w, b


if __name__ == "__main__":
    # Small, (8,128)-friendly demo shapes (module defaults scaled down):
    # input_dim = 256 -> each modality contributes half = 128; output_dim = 100.
    B, half_dim, output_dim = 256, 128, 100
    input_dim = 2 * half_dim

    key = jax.random.PRNGKey(0)
    kx, ky, k1, k2 = jax.random.split(key, 4)

    # bf16 streaming (kernel is HBM-bound): halves bytes vs f32 on every gen.
    x = jax.random.normal(kx, (B, half_dim), jnp.float32).astype(jnp.bfloat16)
    y = jax.random.normal(ky, (B, half_dim), jnp.float32).astype(jnp.bfloat16)
    w_out, b_out = _init_linear(k1, output_dim, input_dim)
    w_aux, b_aux = _init_linear(k2, output_dim, input_dim)

    # One-time weight prep (outside the per-call forward path).
    params = prepare_concat_fusion_params(w_out, b_out, w_aux, b_aux,
                                          param_dtype=jnp.bfloat16)

    rx, ry, out, aux = concat_fusion_vanilla_forward(x, y, params)
    jax.block_until_ready((rx, ry, out, aux))

    # Pure-JAX reference with the SAME bf16-rounded activations / weights,
    # accumulated in f32 (mirrors the kernel's numerics).
    cat = jnp.concatenate([x, y], axis=1).astype(jnp.float32)
    ref_out = cat @ params["w_out"].astype(jnp.float32) + b_out
    ref_aux = cat @ params["w_aux"].astype(jnp.float32) + b_aux

    assert out.shape == (B, output_dim) and aux.shape == (B, output_dim)
    assert out.dtype == x.dtype and aux.dtype == x.dtype
    assert jnp.allclose(out.astype(jnp.float32), ref_out, atol=3e-2, rtol=3e-2)
    assert jnp.allclose(aux.astype(jnp.float32), ref_aux, atol=3e-2, rtol=3e-2)
    assert jnp.array_equal(rx, x) and jnp.array_equal(ry, y)

    print("KERNEL_OK")
</pallas_src>

<mosaic_0001>
module attributes {stable_mosaic.version = 11 : i64} {
  func.func @_fusion_kernel(%arg0: i32, %arg1: memref<256x128xbf16, #tpu.memory_space<vmem>>, %arg2: memref<256x128xbf16, #tpu.memory_space<vmem>>, %arg3: memref<256x100xbf16, #tpu.memory_space<vmem>>, %arg4: memref<256x100xbf16, #tpu.memory_space<vmem>>, %arg5: memref<1x100xf32, #tpu.memory_space<vmem>>, %arg6: memref<1x100xf32, #tpu.memory_space<vmem>>, %arg7: memref<256x100xbf16, #tpu.memory_space<vmem>>, %arg8: memref<256x100xbf16, #tpu.memory_space<vmem>>) attributes {dimension_semantics = [#tpu.dimension_semantics<parallel>], iteration_bounds = array<i64: 1>, scalar_prefetch = 0 : i64, scratch_operands = 0 : i64, tpu.core_type = #tpu.core_type<tc>, window_params = [{transform_indices = @transform_0, window_bounds = array<i64: 256, 128>}, {transform_indices = @transform_1, window_bounds = array<i64: 256, 128>}, {pipeline_mode = #tpu.pipeline_mode<synchronous>, transform_indices = @transform_2, window_bounds = array<i64: 256, 100>}, {pipeline_mode = #tpu.pipeline_mode<synchronous>, transform_indices = @transform_3, window_bounds = array<i64: 256, 100>}, {pipeline_mode = #tpu.pipeline_mode<synchronous>, transform_indices = @transform_4, window_bounds = array<i64: 1, 100>}, {pipeline_mode = #tpu.pipeline_mode<synchronous>, transform_indices = @transform_5, window_bounds = array<i64: 1, 100>}, {transform_indices = @transform_6, window_bounds = array<i64: 256, 100>}, {transform_indices = @transform_7, window_bounds = array<i64: 256, 100>}]} {
    %c0 = arith.constant 0 : index
    %c0_0 = arith.constant 0 : index
    %0 = vector.load %arg1[%c0, %c0_0] : memref<256x128xbf16, #tpu.memory_space<vmem>>, vector<256x128xbf16>
    %c0_1 = arith.constant 0 : index
    %c0_2 = arith.constant 0 : index
    %1 = vector.load %arg2[%c0_1, %c0_2] : memref<256x128xbf16, #tpu.memory_space<vmem>>, vector<256x128xbf16>
    %2 = tpu.concatenate %0, %1 in 1 : vector<256x128xbf16>, vector<256x128xbf16> -> vector<256x256xbf16>
    %c0_3 = arith.constant 0 : index
    %c0_4 = arith.constant 0 : index
    %3 = vector.load %arg3[%c0_3, %c0_4] : memref<256x100xbf16, #tpu.memory_space<vmem>>, vector<256x100xbf16>
    %cst = arith.constant dense<0.000000e+00> : vector<256x100xf32>
    %4 = tpu.matmul %2, %3, %cst {dimension_numbers = #tpu.dot_dimension_numbers<[1], [0], [0], [1], [0, 0, 1, 1], [], []>} : vector<256x256xbf16>, vector<256x100xbf16>, vector<256x100xf32> -> vector<256x100xf32>
    %c0_5 = arith.constant 0 : index
    %c0_6 = arith.constant 0 : index
    %5 = vector.load %arg5[%c0_5, %c0_6] : memref<1x100xf32, #tpu.memory_space<vmem>>, vector<1x100xf32>
    %6 = vector.broadcast %5 : vector<1x100xf32> to vector<256x100xf32>
    %7 = arith.addf %4, %6 : vector<256x100xf32>
    %c0_7 = arith.constant 0 : index
    %c0_8 = arith.constant 0 : index
    %8 = vector.load %arg4[%c0_7, %c0_8] : memref<256x100xbf16, #tpu.memory_space<vmem>>, vector<256x100xbf16>
    %cst_9 = arith.constant dense<0.000000e+00> : vector<256x100xf32>
    %9 = tpu.matmul %2, %8, %cst_9 {dimension_numbers = #tpu.dot_dimension_numbers<[1], [0], [0], [1], [0, 0, 1, 1], [], []>} : vector<256x256xbf16>, vector<256x100xbf16>, vector<256x100xf32> -> vector<256x100xf32>
    %c0_10 = arith.constant 0 : index
    %c0_11 = arith.constant 0 : index
    %10 = vector.load %arg6[%c0_10, %c0_11] : memref<1x100xf32, #tpu.memory_space<vmem>>, vector<1x100xf32>
    %11 = vector.broadcast %10 : vector<1x100xf32> to vector<256x100xf32>
    %12 = arith.addf %9, %11 : vector<256x100xf32>
    %13 = arith.truncf %7 : vector<256x100xf32> to vector<256x100xbf16>
    %c0_12 = arith.constant 0 : index
    %c0_13 = arith.constant 0 : index
    %14 = vector.load %arg7[%c0_12, %c0_13] : memref<256x100xbf16, #tpu.memory_space<vmem>>, vector<256x100xbf16>
    tpu.vector_store %arg7[%c0_12, %c0_13], %13 {strides = array<i32>} : memref<256x100xbf16, #tpu.memory_space<vmem>>, vector<256x100xbf16>,
    %15 = arith.truncf %12 : vector<256x100xf32> to vector<256x100xbf16>
    %c0_14 = arith.constant 0 : index
    %c0_15 = arith.constant 0 : index
    %16 = vector.load %arg8[%c0_14, %c0_15] : memref<256x100xbf16, #tpu.memory_space<vmem>>, vector<256x100xbf16>
    tpu.vector_store %arg8[%c0_14, %c0_15], %15 {strides = array<i32>} : memref<256x100xbf16, #tpu.memory_space<vmem>>, vector<256x100xbf16>,
    return
  }
  func.func @transform_0(%arg0: i32) -> (i32, i32) {
    %c0_i32 = arith.constant 0 : i32
    %c0_i32_0 = arith.constant 0 : i32
    return %arg0, %c0_i32 : i32, i32
  }
  func.func @transform_1(%arg0: i32) -> (i32, i32) {
    %c0_i32 = arith.constant 0 : i32
    %c0_i32_0 = arith.constant 0 : i32
    return %arg0, %c0_i32 : i32, i32
  }
  func.func @transform_2(%arg0: i32) -> (i32, i32) {
    %c0_i32 = arith.constant 0 : i32
    %c0_i32_0 = arith.constant 0 : i32
    %c0_i32_1 = arith.constant 0 : i32
    return %c0_i32, %c0_i32_0 : i32, i32
  }
  func.func @transform_3(%arg0: i32) -> (i32, i32) {
    %c0_i32 = arith.constant 0 : i32
    %c0_i32_0 = arith.constant 0 : i32
    %c0_i32_1 = arith.constant 0 : i32
    return %c0_i32, %c0_i32_0 : i32, i32
  }
  func.func @transform_4(%arg0: i32) -> (i32, i32) {
    %c0_i32 = arith.constant 0 : i32
    %c0_i32_0 = arith.constant 0 : i32
    %c0_i32_1 = arith.constant 0 : i32
    return %c0_i32, %c0_i32_0 : i32, i32
  }
  func.func @transform_5(%arg0: i32) -> (i32, i32) {
    %c0_i32 = arith.constant 0 : i32
    %c0_i32_0 = arith.constant 0 : i32
    %c0_i32_1 = arith.constant 0 : i32
    return %c0_i32, %c0_i32_0 : i32, i32
  }
  func.func @transform_6(%arg0: i32) -> (i32, i32) {
    %c0_i32 = arith.constant 0 : i32
    %c0_i32_0 = arith.constant 0 : i32
    return %arg0, %c0_i32 : i32, i32
  }
  func.func @transform_7(%arg0: i32) -> (i32, i32) {
    %c0_i32 = arith.constant 0 : i32
    %c0_i32_0 = arith.constant 0 : i32
    return %arg0, %c0_i32 : i32, i32
  }
}

</mosaic_0001>

<llo_original>
// kernel: _fused_forward.1
$region0: #{_fused_forward.1}
  #allocation0 [shape = 'u32[]', space=smem, size = 0x4, offset = 0x4, fixed_abs, tag = 'smem constant byte address 0x4 - core index']
  #allocation1 [shape = 'u32[72,128]{1,0:T(1,128)}', space=vmem, size = 0x9000, scoped, tag = 'internal scratch']
  %s0 = inlined_call_operand.vmem [shape: bf16[256,128], index: 0, kind: input, shape index: {}]
  %s1 = inlined_call_operand.vmem [shape: bf16[256,128], index: 1, kind: input, shape index: {}]
  %s2 = inlined_call_operand.vmem [shape: bf16[256,100], index: 2, kind: input, shape index: {}]
  %s3 = inlined_call_operand.vmem [shape: bf16[256,100], index: 3, kind: input, shape index: {}]
  %s4 = inlined_call_operand.vmem [shape: f32[1,100], index: 4, kind: input, shape index: {}]
  %s5 = inlined_call_operand.vmem [shape: f32[1,100], index: 5, kind: input, shape index: {}]
  %s6 = inlined_call_operand.vmem [shape: bf16[256,100], index: 6, kind: output, shape index: {0}]
  %s7 = inlined_call_operand.vmem [shape: bf16[256,100], index: 7, kind: output, shape index: {1}]
  %8 = xla_tuple %s6, %s7
  %s9 = sld [smem:[#allocation0]]
  $region42: #{_fused_forward.1} parent=0
    _
  %s11 = ssub.s32 1, %s9
  %s12 = scalar_select 0, %s11, %s9
  // Predicated region
  $region2: #{_fused_forward.1} parent=0 // pred_check
    _
  $region3: #{_fused_forward.1} parent=0 // pred_check_branch
    %14 = sbr.rel (0) target = $region5
  $region4: #{_fused_forward.1} parent=0 // pred_region
    _
  $region5: #{_fused_forward.1} parent=0 // pred_fallthru
    _
  // Predicated region
  $region6: #{_fused_forward.1} parent=0 // pred_check
    _
  $region7: #{_fused_forward.1} parent=0 // pred_check_branch
    %16 = sbr.rel (0) target = $region9
  $region8: #{_fused_forward.1} parent=0 // pred_region
    _
  $region9: #{_fused_forward.1} parent=0 // pred_fallthru
    _
  // Predicated region
  $region10: #{_fused_forward.1} parent=0 // pred_check
    _
  $region11: #{_fused_forward.1} parent=0 // pred_check_branch
    %18 = sbr.rel (0) target = $region13
  $region12: #{_fused_forward.1} parent=0 // pred_region
    _
  $region13: #{_fused_forward.1} parent=0 // pred_fallthru
    _
  // Predicated region
  $region14: #{_fused_forward.1} parent=0 // pred_check
    _
  $region15: #{_fused_forward.1} parent=0 // pred_check_branch
    %20 = sbr.rel (0) target = $region17
  $region16: #{_fused_forward.1} parent=0 // pred_region
    _
  $region17: #{_fused_forward.1} parent=0 // pred_fallthru
    _
  // Predicated region
  $region18: #{_fused_forward.1} parent=0 // pred_check
    _
  $region19: #{_fused_forward.1} parent=0 // pred_check_branch
    %22 = sbr.rel (0) target = $region21
  $region20: #{_fused_forward.1} parent=0 // pred_region
    _
  $region21: #{_fused_forward.1} parent=0 // pred_fallthru
    _
  // Predicated region
  $region22: #{_fused_forward.1} parent=0 // pred_check
    _
  $region23: #{_fused_forward.1} parent=0 // pred_check_branch
    %24 = sbr.rel (0) target = $region25
  $region24: #{_fused_forward.1} parent=0 // pred_region
    _
  $region25: #{_fused_forward.1} parent=0 // pred_fallthru
    _
  %v25 = vld [vmem:[%s0] sm:$0xf]
  %v26 = vld [vmem:[%s0 + $0x4] sm:$0xf]
  %v27 = vld [vmem:[%s0 + $0x8] sm:$0xf]
  %v28 = vld [vmem:[%s0 + $0xc] sm:$0xf]
  %v29 = vld [vmem:[%s0 + $0x10] sm:$0xf]
  %v30 = vld [vmem:[%s0 + $0x14] sm:$0xf]
  %v31 = vld [vmem:[%s0 + $0x18] sm:$0xf]
  %v32 = vld [vmem:[%s0 + $0x1c] sm:$0xf]
  %v33 = vld [vmem:[%s0 + $0x20] sm:$0xf]
  %v34 = vld [vmem:[%s0 + $0x24] sm:$0xf]
  %v35 = vld [vmem:[%s0 + $0x28] sm:$0xf]
  %v36 = vld [vmem:[%s0 + $0x2c] sm:$0xf]
  %v37 = vld [vmem:[%s0 + $0x30] sm:$0xf]
  %v38 = vld [vmem:[%s0 + $0x34] sm:$0xf]
  %v39 = vld [vmem:[%s0 + $0x38] sm:$0xf]
  %v40 = vld [vmem:[%s0 + $0x3c] sm:$0xf]
  %v41 = vld [vmem:[%s0 + $0x40] sm:$0xf]
  %v42 = vld [vmem:[%s0 + $0x44] sm:$0xf]
  %v43 = vld [vmem:[%s0 + $0x48] sm:$0xf]
  %v44 = vld [vmem:[%s0 + $0x4c] sm:$0xf]
  %v45 = vld [vmem:[%s0 + $0x50] sm:$0xf]
  %v46 = vld [vmem:[%s0 + $0x54] sm:$0xf]
  %v47 = vld [vmem:[%s0 + $0x58] sm:$0xf]
  %v48 = vld [vmem:[%s0 + $0x5c] sm:$0xf]
  %v49 = vld [vmem:[%s0 + $0x60] sm:$0xf]
  %v50 = vld [vmem:[%s0 + $0x64] sm:$0xf]
  %v51 = vld [vmem:[%s0 + $0x68] sm:$0xf]
  %v52 = vld [vmem:[%s0 + $0x6c] sm:$0xf]
  %v53 = vld [vmem:[%s0 + $0x70] sm:$0xf]
  %v54 = vld [vmem:[%s0 + $0x74] sm:$0xf]
  %v55 = vld [vmem:[%s0 + $0x78] sm:$0xf]
  %v56 = vld [vmem:[%s0 + $0x7c] sm:$0xf]
  %v57 = vld [vmem:[%s1] sm:$0xf]
  %v58 = vld [vmem:[%s1 + $0x4] sm:$0xf]
  %v59 = vld [vmem:[%s1 + $0x8] sm:$0xf]
  %v60 = vld [vmem:[%s1 + $0xc] sm:$0xf]
  %v61 = vld [vmem:[%s1 + $0x10] sm:$0xf]
  %v62 = vld [vmem:[%s1 + $0x14] sm:$0xf]
  %v63 = vld [vmem:[%s1 + $0x18] sm:$0xf]
  %v64 = vld [vmem:[%s1 + $0x1c] sm:$0xf]
  %v65 = vld [vmem:[%s1 + $0x20] sm:$0xf]
  %v66 = vld [vmem:[%s1 + $0x24] sm:$0xf]
  %v67 = vld [vmem:[%s1 + $0x28] sm:$0xf]
  %v68 = vld [vmem:[%s1 + $0x2c] sm:$0xf]
  %v69 = vld [vmem:[%s1 + $0x30] sm:$0xf]
  %v70 = vld [vmem:[%s1 + $0x34] sm:$0xf]
  %v71 = vld [vmem:[%s1 + $0x38] sm:$0xf]
  %v72 = vld [vmem:[%s1 + $0x3c] sm:$0xf]
  %v73 = vld [vmem:[%s1 + $0x40] sm:$0xf]
  %v74 = vld [vmem:[%s1 + $0x44] sm:$0xf]
  %v75 = vld [vmem:[%s1 + $0x48] sm:$0xf]
  %v76 = vld [vmem:[%s1 + $0x4c] sm:$0xf]
  %v77 = vld [vmem:[%s1 + $0x50] sm:$0xf]
  %v78 = vld [vmem:[%s1 + $0x54] sm:$0xf]
  %v79 = vld [vmem:[%s1 + $0x58] sm:$0xf]
  %v80 = vld [vmem:[%s1 + $0x5c] sm:$0xf]
  %v81 = vld [vmem:[%s1 + $0x60] sm:$0xf]
  %v82 = vld [vmem:[%s1 + $0x64] sm:$0xf]
  %v83 = vld [vmem:[%s1 + $0x68] sm:$0xf]
  %v84 = vld [vmem:[%s1 + $0x6c] sm:$0xf]
  %v85 = vld [vmem:[%s1 + $0x70] sm:$0xf]
  %v86 = vld [vmem:[%s1 + $0x74] sm:$0xf]
  %v87 = vld [vmem:[%s1 + $0x78] sm:$0xf]
  %v88 = vld [vmem:[%s1 + $0x7c] sm:$0xf]
  %v121 = vunpack.c.l.b16 %v25
  %v122 = vunpack.c.l.b16 %v26
  %v123 = vunpack.c.l.b16 %v27
  %v124 = vunpack.c.l.b16 %v28
  %v125 = vunpack.c.l.b16 %v29
  %v126 = vunpack.c.l.b16 %v30
  %v127 = vunpack.c.l.b16 %v31
  %v128 = vunpack.c.l.b16 %v32
  %v129 = vunpack.c.l.b16 %v33
  %v130 = vunpack.c.l.b16 %v34
  %v131 = vunpack.c.l.b16 %v35
  %v132 = vunpack.c.l.b16 %v36
  %v133 = vunpack.c.l.b16 %v37
  %v134 = vunpack.c.l.b16 %v38
  %v135 = vunpack.c.l.b16 %v39
  %v136 = vunpack.c.l.b16 %v40
  %v137 = vunpack.c.l.b16 %v41
  %v138 = vunpack.c.l.b16 %v42
  %v139 = vunpack.c.l.b16 %v43
  %v140 = vunpack.c.l.b16 %v44
  %v141 = vunpack.c.l.b16 %v45
  %v142 = vunpack.c.l.b16 %v46
  %v143 = vunpack.c.l.b16 %v47
  %v144 = vunpack.c.l.b16 %v48
  %v145 = vunpack.c.l.b16 %v49
  %v146 = vunpack.c.l.b16 %v50
  %v147 = vunpack.c.l.b16 %v51
  %v148 = vunpack.c.l.b16 %v52
  %v149 = vunpack.c.l.b16 %v53
  %v150 = vunpack.c.l.b16 %v54
  %v151 = vunpack.c.l.b16 %v55
  %v152 = vunpack.c.l.b16 %v56
  %v153 = vpack.c.b16 %v122, %v121
  %v154 = vpack.c.b16 %v124, %v123
  %v155 = vpack.c.b16 %v126, %v125
  %v156 = vpack.c.b16 %v128, %v127
  %v157 = vpack.c.b16 %v130, %v129
  %v158 = vpack.c.b16 %v132, %v131
  %v159 = vpack.c.b16 %v134, %v133
  %v160 = vpack.c.b16 %v136, %v135
  %v161 = vpack.c.b16 %v138, %v137
  %v162 = vpack.c.b16 %v140, %v139
  %v163 = vpack.c.b16 %v142, %v141
  %v164 = vpack.c.b16 %v144, %v143
  %v165 = vpack.c.b16 %v146, %v145
  %v166 = vpack.c.b16 %v148, %v147
  %v167 = vpack.c.b16 %v150, %v149
  %v168 = vpack.c.b16 %v152, %v151
  %v217 = vunpack.c.l.b16 %v57
  %v218 = vunpack.c.l.b16 %v58
  %v219 = vunpack.c.l.b16 %v59
  %v220 = vunpack.c.l.b16 %v60
  %v221 = vunpack.c.l.b16 %v61
  %v222 = vunpack.c.l.b16 %v62
  %v223 = vunpack.c.l.b16 %v63
  %v224 = vunpack.c.l.b16 %v64
  %v225 = vunpack.c.l.b16 %v65
  %v226 = vunpack.c.l.b16 %v66
  %v227 = vunpack.c.l.b16 %v67
  %v228 = vunpack.c.l.b16 %v68
  %v229 = vunpack.c.l.b16 %v69
  %v230 = vunpack.c.l.b16 %v70
  %v231 = vunpack.c.l.b16 %v71
  %v232 = vunpack.c.l.b16 %v72
  %v233 = vunpack.c.l.b16 %v73
  %v234 = vunpack.c.l.b16 %v74
  %v235 = vunpack.c.l.b16 %v75
  %v236 = vunpack.c.l.b16 %v76
  %v237 = vunpack.c.l.b16 %v77
  %v238 = vunpack.c.l.b16 %v78
  %v239 = vunpack.c.l.b16 %v79
  %v240 = vunpack.c.l.b16 %v80
  %v241 = vunpack.c.l.b16 %v81
  %v242 = vunpack.c.l.b16 %v82
  %v243 = vunpack.c.l.b16 %v83
  %v244 = vunpack.c.l.b16 %v84
  %v245 = vunpack.c.l.b16 %v85
  %v246 = vunpack.c.l.b16 %v86
  %v247 = vunpack.c.l.b16 %v87
  %v248 = vunpack.c.l.b16 %v88
  %v249 = vpack.c.b16 %v218, %v217
  %v250 = vpack.c.b16 %v220, %v219
  %v251 = vpack.c.b16 %v222, %v221
  %v252 = vpack.c.b16 %v224, %v223
  %v253 = vpack.c.b16 %v226, %v225
  %v254 = vpack.c.b16 %v228, %v227
  %v255 = vpack.c.b16 %v230, %v229
  %v256 = vpack.c.b16 %v232, %v231
  %v257 = vpack.c.b16 %v234, %v233
  %v258 = vpack.c.b16 %v236, %v235
  %v259 = vpack.c.b16 %v238, %v237
  %v260 = vpack.c.b16 %v240, %v239
  %v261 = vpack.c.b16 %v242, %v241
  %v262 = vpack.c.b16 %v244, %v243
  %v263 = vpack.c.b16 %v246, %v245
  %v264 = vpack.c.b16 %v248, %v247
  %v281 = vld [vmem:[%s2] sm:$0xf]
  %v282 = vld [vmem:[%s2 + $0x4] sm:$0xf]
  %v283 = vld [vmem:[%s2 + $0x8] sm:$0xf]
  %v284 = vld [vmem:[%s2 + $0xc] sm:$0xf]
  %v285 = vld [vmem:[%s2 + $0x10] sm:$0xf]
  %v286 = vld [vmem:[%s2 + $0x14] sm:$0xf]
  %v287 = vld [vmem:[%s2 + $0x18] sm:$0xf]
  %v288 = vld [vmem:[%s2 + $0x1c] sm:$0xf]
  %v289 = vld [vmem:[%s2 + $0x20] sm:$0xf]
  %v290 = vld [vmem:[%s2 + $0x24] sm:$0xf]
  %v291 = vld [vmem:[%s2 + $0x28] sm:$0xf]
  %v292 = vld [vmem:[%s2 + $0x2c] sm:$0xf]
  %v293 = vld [vmem:[%s2 + $0x30] sm:$0xf]
  %v294 = vld [vmem:[%s2 + $0x34] sm:$0xf]
  %v295 = vld [vmem:[%s2 + $0x38] sm:$0xf]
  %v296 = vld [vmem:[%s2 + $0x3c] sm:$0xf]
  %v297 = vld [vmem:[%s2 + $0x40] sm:$0xf]
  %v298 = vld [vmem:[%s2 + $0x44] sm:$0xf]
  %v299 = vld [vmem:[%s2 + $0x48] sm:$0xf]
  %v300 = vld [vmem:[%s2 + $0x4c] sm:$0xf]
  %v301 = vld [vmem:[%s2 + $0x50] sm:$0xf]
  %v302 = vld [vmem:[%s2 + $0x54] sm:$0xf]
  %v303 = vld [vmem:[%s2 + $0x58] sm:$0xf]
  %v304 = vld [vmem:[%s2 + $0x5c] sm:$0xf]
  %v305 = vld [vmem:[%s2 + $0x60] sm:$0xf]
  %v306 = vld [vmem:[%s2 + $0x64] sm:$0xf]
  %v307 = vld [vmem:[%s2 + $0x68] sm:$0xf]
  %v308 = vld [vmem:[%s2 + $0x6c] sm:$0xf]
  %v309 = vld [vmem:[%s2 + $0x70] sm:$0xf]
  %v310 = vld [vmem:[%s2 + $0x74] sm:$0xf]
  %v311 = vld [vmem:[%s2 + $0x78] sm:$0xf]
  %v312 = vld [vmem:[%s2 + $0x7c] sm:$0xf]
  %v313 = vld [vmem:[%s4] sm:$0x1]
  %v315 = vperm.slane %v313, 0
  %v349 = vunpack.c.l.b16 %v281
  %v350 = vunpack.c.l.b16 %v282
  %v351 = vunpack.c.l.b16 %v283
  %v352 = vunpack.c.l.b16 %v284
  %v353 = vunpack.c.l.b16 %v285
  %v354 = vunpack.c.l.b16 %v286
  %v355 = vunpack.c.l.b16 %v287
  %v356 = vunpack.c.l.b16 %v288
  %v357 = vunpack.c.l.b16 %v289
  %v358 = vunpack.c.l.b16 %v290
  %v359 = vunpack.c.l.b16 %v291
  %v360 = vunpack.c.l.b16 %v292
  %v361 = vunpack.c.l.b16 %v293
  %v362 = vunpack.c.l.b16 %v294
  %v363 = vunpack.c.l.b16 %v295
  %v364 = vunpack.c.l.b16 %v296
  %v365 = vunpack.c.l.b16 %v297
  %v366 = vunpack.c.l.b16 %v298
  %v367 = vunpack.c.l.b16 %v299
  %v368 = vunpack.c.l.b16 %v300
  %v369 = vunpack.c.l.b16 %v301
  %v370 = vunpack.c.l.b16 %v302
  %v371 = vunpack.c.l.b16 %v303
  %v372 = vunpack.c.l.b16 %v304
  %v373 = vunpack.c.l.b16 %v305
  %v374 = vunpack.c.l.b16 %v306
  %v375 = vunpack.c.l.b16 %v307
  %v376 = vunpack.c.l.b16 %v308
  %v377 = vunpack.c.l.b16 %v309
  %v378 = vunpack.c.l.b16 %v310
  %v379 = vunpack.c.l.b16 %v311
  %v380 = vunpack.c.l.b16 %v312
  %v381 = vpack.c.b16 %v350, %v349
  %v382 = vpack.c.b16 %v352, %v351
  %v383 = vpack.c.b16 %v354, %v353
  %v384 = vpack.c.b16 %v356, %v355
  %v385 = vpack.c.b16 %v358, %v357
  %v386 = vpack.c.b16 %v360, %v359
  %v387 = vpack.c.b16 %v362, %v361
  %v388 = vpack.c.b16 %v364, %v363
  %v389 = vpack.c.b16 %v366, %v365
  %v390 = vpack.c.b16 %v368, %v367
  %v391 = vpack.c.b16 %v370, %v369
  %v392 = vpack.c.b16 %v372, %v371
  %v393 = vpack.c.b16 %v374, %v373
  %v394 = vpack.c.b16 %v376, %v375
  %v395 = vpack.c.b16 %v378, %v377
  %v396 = vpack.c.b16 %v380, %v379
  %413 = vmatpush.bf16.msra.mxu0 %v388
  %414 = vmatpush.bf16.msra.mxu0 %v387
  %415 = vmatpush.bf16.msra.mxu0 %v386
  %416 = vmatpush.bf16.msra.mxu0 %v385
  %417 = vmatpush.bf16.msra.mxu0 %v384
  %418 = vmatpush.bf16.msra.mxu0 %v383
  %419 = vmatpush.bf16.msra.mxu0 %v382
  %420 = vmatpush.bf16.msra.mxu0 %v381
  %421 = vmatmul.bf16.gmra.mxu0 %v153
  %v422 = vpop.f32.mrf.mxu0
  %v423 = vadd.f32 %v315, %v422
  %v424 = vpop.f32.mrf.mxu0
  %v425 = vadd.f32 %v315, %v424
  %426 = vmatmul.bf16.gmra.mxu0 %v154
  %v427 = vpop.f32.mrf.mxu0
  %v428 = vadd.f32 %v315, %v427
  %v429 = vpop.f32.mrf.mxu0
  %v430 = vadd.f32 %v315, %v429
  %431 = vmatmul.bf16.gmra.mxu0 %v155
  %v432 = vpop.f32.mrf.mxu0
  %v433 = vadd.f32 %v315, %v432
  %v434 = vpop.f32.mrf.mxu0
  %v435 = vadd.f32 %v315, %v434
  %436 = vmatmul.bf16.gmra.mxu0 %v156
  %v437 = vpop.f32.mrf.mxu0
  %v438 = vadd.f32 %v315, %v437
  %v439 = vpop.f32.mrf.mxu0
  %v440 = vadd.f32 %v315, %v439
  %441 = vmatmul.bf16.gmra.mxu0 %v157
  %v442 = vpop.f32.mrf.mxu0
  %v443 = vadd.f32 %v315, %v442
  %v444 = vpop.f32.mrf.mxu0
  %v445 = vadd.f32 %v315, %v444
  %446 = vmatmul.bf16.gmra.mxu0 %v158
  %v447 = vpop.f32.mrf.mxu0
  %v448 = vadd.f32 %v315, %v447
  %v449 = vpop.f32.mrf.mxu0
  %v450 = vadd.f32 %v315, %v449
  %451 = vmatmul.bf16.gmra.mxu0 %v159
  %v452 = vpop.f32.mrf.mxu0
  %v453 = vadd.f32 %v315, %v452
  %v454 = vpop.f32.mrf.mxu0
  %v455 = vadd.f32 %v315, %v454
  %456 = vmatmul.bf16.gmra.mxu0 %v160
  %v457 = vpop.f32.mrf.mxu0
  %v458 = vadd.f32 %v315, %v457
  %v459 = vpop.f32.mrf.mxu0
  %v460 = vadd.f32 %v315, %v459
  %461 = vmatmul.bf16.gmra.mxu0 %v161
  %v462 = vpop.f32.mrf.mxu0
  %v463 = vadd.f32 %v315, %v462
  %v464 = vpop.f32.mrf.mxu0
  %v465 = vadd.f32 %v315, %v464
  %466 = vmatmul.bf16.gmra.mxu0 %v162
  %v467 = vpop.f32.mrf.mxu0
  %v468 = vadd.f32 %v315, %v467
  %v469 = vpop.f32.mrf.mxu0
  %v470 = vadd.f32 %v315, %v469
  %471 = vmatmul.bf16.gmra.mxu0 %v163
  %v472 = vpop.f32.mrf.mxu0
  %v473 = vadd.f32 %v315, %v472
  %v474 = vpop.f32.mrf.mxu0
  %v475 = vadd.f32 %v315, %v474
  %476 = vmatmul.bf16.gmra.mxu0 %v164
  %v477 = vpop.f32.mrf.mxu0
  %v478 = vadd.f32 %v315, %v477
  %v479 = vpop.f32.mrf.mxu0
  %v480 = vadd.f32 %v315, %v479
  %481 = vmatmul.bf16.gmra.mxu0 %v165
  %v482 = vpop.f32.mrf.mxu0
  %v483 = vadd.f32 %v315, %v482
  %v484 = vpop.f32.mrf.mxu0
  %v485 = vadd.f32 %v315, %v484
  %486 = vmatmul.bf16.gmra.mxu0 %v166
  %v487 = vpop.f32.mrf.mxu0
  %v488 = vadd.f32 %v315, %v487
  %v489 = vpop.f32.mrf.mxu0
  %v490 = vadd.f32 %v315, %v489
  %491 = vmatmul.bf16.gmra.mxu0 %v167
  %v492 = vpop.f32.mrf.mxu0
  %v493 = vadd.f32 %v315, %v492
  %v494 = vpop.f32.mrf.mxu0
  %v495 = vadd.f32 %v315, %v494
  %496 = vmatmul.bf16.gmra.mxu0 %v168
  %v497 = vpop.f32.mrf.mxu0
  %v498 = vadd.f32 %v315, %v497
  %v499 = vpop.f32.mrf.mxu0
  %v500 = vadd.f32 %v315, %v499
  %501 = vdwg.mxu0
  %502 = vmatpush.bf16.msra.mxu0 %v396
  %503 = vmatpush.bf16.msra.mxu0 %v395
  %504 = vmatpush.bf16.msra.mxu0 %v394
  %505 = vmatpush.bf16.msra.mxu0 %v393
  %506 = vmatpush.bf16.msra.mxu0 %v392
  %507 = vmatpush.bf16.msra.mxu0 %v391
  %508 = vmatpush.bf16.msra.mxu0 %v390
  %509 = vmatpush.bf16.msra.mxu0 %v389
  %510 = vmatmul.bf16.gmra.mxu0 %v249
  %v511 = vpop.f32.mrf.mxu0
  %v512 = vadd.f32 %v423, %v511
  %v513 = vpop.f32.mrf.mxu0
  %v514 = vadd.f32 %v425, %v513
  %515 = vmatmul.bf16.gmra.mxu0 %v250
  %v516 = vpop.f32.mrf.mxu0
  %v517 = vadd.f32 %v428, %v516
  %v518 = vpop.f32.mrf.mxu0
  %v519 = vadd.f32 %v430, %v518
  %520 = vmatmul.bf16.gmra.mxu0 %v251
  %v521 = vpop.f32.mrf.mxu0
  %v522 = vadd.f32 %v433, %v521
  %v523 = vpop.f32.mrf.mxu0
  %v524 = vadd.f32 %v435, %v523
  %525 = vmatmul.bf16.gmra.mxu0 %v252
  %v526 = vpop.f32.mrf.mxu0
  %v527 = vadd.f32 %v438, %v526
  %v528 = vpop.f32.mrf.mxu0
  %v529 = vadd.f32 %v440, %v528
  %530 = vmatmul.bf16.gmra.mxu0 %v253
  %v531 = vpop.f32.mrf.mxu0
  %v532 = vadd.f32 %v443, %v531
  %v533 = vpop.f32.mrf.mxu0
  %v534 = vadd.f32 %v445, %v533
  %535 = vmatmul.bf16.gmra.mxu0 %v254
  %v536 = vpop.f32.mrf.mxu0
  %v537 = vadd.f32 %v448, %v536
  %v538 = vpop.f32.mrf.mxu0
  %v539 = vadd.f32 %v450, %v538
  %540 = vmatmul.bf16.gmra.mxu0 %v255
  %v541 = vpop.f32.mrf.mxu0
  %v542 = vadd.f32 %v453, %v541
  %v543 = vpop.f32.mrf.mxu0
  %v544 = vadd.f32 %v455, %v543
  %545 = vmatmul.bf16.gmra.mxu0 %v256
  %v546 = vpop.f32.mrf.mxu0
  %v547 = vadd.f32 %v458, %v546
  %v548 = vpop.f32.mrf.mxu0
  %v549 = vadd.f32 %v460, %v548
  %550 = vmatmul.bf16.gmra.mxu0 %v257
  %v551 = vpop.f32.mrf.mxu0
  %v552 = vadd.f32 %v463, %v551
  %v553 = vpop.f32.mrf.mxu0
  %v554 = vadd.f32 %v465, %v553
  %555 = vmatmul.bf16.gmra.mxu0 %v258
  %v556 = vpop.f32.mrf.mxu0
  %v557 = vadd.f32 %v468, %v556
  %v558 = vpop.f32.mrf.mxu0
  %v559 = vadd.f32 %v470, %v558
  %560 = vmatmul.bf16.gmra.mxu0 %v259
  %v561 = vpop.f32.mrf.mxu0
  %v562 = vadd.f32 %v473, %v561
  %v563 = vpop.f32.mrf.mxu0
  %v564 = vadd.f32 %v475, %v563
  %565 = vmatmul.bf16.gmra.mxu0 %v260
  %v566 = vpop.f32.mrf.mxu0
  %v567 = vadd.f32 %v478, %v566
  %v568 = vpop.f32.mrf.mxu0
  %v569 = vadd.f32 %v480, %v568
  %570 = vmatmul.bf16.gmra.mxu0 %v261
  %v571 = vpop.f32.mrf.mxu0
  %v572 = vadd.f32 %v483, %v571
  %v573 = vpop.f32.mrf.mxu0
  %v574 = vadd.f32 %v485, %v573
  %575 = vmatmul.bf16.gmra.mxu0 %v262
  %v576 = vpop.f32.mrf.mxu0
  %v577 = vadd.f32 %v488, %v576
  %v578 = vpop.f32.mrf.mxu0
  %v579 = vadd.f32 %v490, %v578
  %580 = vmatmul.bf16.gmra.mxu0 %v263
  %v581 = vpop.f32.mrf.mxu0
  %v582 = vadd.f32 %v493, %v581
  %v583 = vpop.f32.mrf.mxu0
  %v584 = vadd.f32 %v495, %v583
  %585 = vmatmul.bf16.gmra.mxu0 %v264
  %v586 = vpop.f32.mrf.mxu0
  %v587 = vadd.f32 %v498, %v586
  %v588 = vpop.f32.mrf.mxu0
  %v589 = vadd.f32 %v500, %v588
  %590 = vdwg.mxu0
  %v591 = vld [vmem:[%s3] sm:$0xf]
  %v592 = vld [vmem:[%s3 + $0x4] sm:$0xf]
  %v593 = vld [vmem:[%s3 + $0x8] sm:$0xf]
  %v594 = vld [vmem:[%s3 + $0xc] sm:$0xf]
  %v595 = vld [vmem:[%s3 + $0x10] sm:$0xf]
  %v596 = vld [vmem:[%s3 + $0x14] sm:$0xf]
  %v597 = vld [vmem:[%s3 + $0x18] sm:$0xf]
  %v598 = vld [vmem:[%s3 + $0x1c] sm:$0xf]
  %v599 = vld [vmem:[%s3 + $0x20] sm:$0xf]
  %v600 = vld [vmem:[%s3 + $0x24] sm:$0xf]
  %v601 = vld [vmem:[%s3 + $0x28] sm:$0xf]
  %v602 = vld [vmem:[%s3 + $0x2c] sm:$0xf]
  %v603 = vld [vmem:[%s3 + $0x30] sm:$0xf]
  %v604 = vld [vmem:[%s3 + $0x34] sm:$0xf]
  %v605 = vld [vmem:[%s3 + $0x38] sm:$0xf]
  %v606 = vld [vmem:[%s3 + $0x3c] sm:$0xf]
  %v607 = vld [vmem:[%s3 + $0x40] sm:$0xf]
  %v608 = vld [vmem:[%s3 + $0x44] sm:$0xf]
  %v609 = vld [vmem:[%s3 + $0x48] sm:$0xf]
  %v610 = vld [vmem:[%s3 + $0x4c] sm:$0xf]
  %v611 = vld [vmem:[%s3 + $0x50] sm:$0xf]
  %v612 = vld [vmem:[%s3 + $0x54] sm:$0xf]
  %v613 = vld [vmem:[%s3 + $0x58] sm:$0xf]
  %v614 = vld [vmem:[%s3 + $0x5c] sm:$0xf]
  %v615 = vld [vmem:[%s3 + $0x60] sm:$0xf]
  %v616 = vld [vmem:[%s3 + $0x64] sm:$0xf]
  %v617 = vld [vmem:[%s3 + $0x68] sm:$0xf]
  %v618 = vld [vmem:[%s3 + $0x6c] sm:$0xf]
  %v619 = vld [vmem:[%s3 + $0x70] sm:$0xf]
  %v620 = vld [vmem:[%s3 + $0x74] sm:$0xf]
  %v621 = vld [vmem:[%s3 + $0x78] sm:$0xf]
  %v622 = vld [vmem:[%s3 + $0x7c] sm:$0xf]
  %v623 = vld [vmem:[%s5] sm:$0x1]
  %v625 = vperm.slane %v623, 0
  %v659 = vunpack.c.l.b16 %v591
  %v660 = vunpack.c.l.b16 %v592
  %v661 = vunpack.c.l.b16 %v593
  %v662 = vunpack.c.l.b16 %v594
  %v663 = vunpack.c.l.b16 %v595
  %v664 = vunpack.c.l.b16 %v596
  %v665 = vunpack.c.l.b16 %v597
  %v666 = vunpack.c.l.b16 %v598
  %v667 = vunpack.c.l.b16 %v599
  %v668 = vunpack.c.l.b16 %v600
  %v669 = vunpack.c.l.b16 %v601
  %v670 = vunpack.c.l.b16 %v602
  %v671 = vunpack.c.l.b16 %v603
  %v672 = vunpack.c.l.b16 %v604
  %v673 = vunpack.c.l.b16 %v605
  %v674 = vunpack.c.l.b16 %v606
  %v675 = vunpack.c.l.b16 %v607
  %v676 = vunpack.c.l.b16 %v608
  %v677 = vunpack.c.l.b16 %v609
  %v678 = vunpack.c.l.b16 %v610
  %v679 = vunpack.c.l.b16 %v611
  %v680 = vunpack.c.l.b16 %v612
  %v681 = vunpack.c.l.b16 %v613
  %v682 = vunpack.c.l.b16 %v614
  %v683 = vunpack.c.l.b16 %v615
  %v684 = vunpack.c.l.b16 %v616
  %v685 = vunpack.c.l.b16 %v617
  %v686 = vunpack.c.l.b16 %v618
  %v687 = vunpack.c.l.b16 %v619
  %v688 = vunpack.c.l.b16 %v620
  %v689 = vunpack.c.l.b16 %v621
  %v690 = vunpack.c.l.b16 %v622
  %v691 = vpack.c.b16 %v660, %v659
  %v692 = vpack.c.b16 %v662, %v661
  %v693 = vpack.c.b16 %v664, %v663
  %v694 = vpack.c.b16 %v666, %v665
  %v695 = vpack.c.b16 %v668, %v667
  %v696 = vpack.c.b16 %v670, %v669
  %v697 = vpack.c.b16 %v672, %v671
  %v698 = vpack.c.b16 %v674, %v673
  %v699 = vpack.c.b16 %v676, %v675
  %v700 = vpack.c.b16 %v678, %v677
  %v701 = vpack.c.b16 %v680, %v679
  %v702 = vpack.c.b16 %v682, %v681
  %v703 = vpack.c.b16 %v684, %v683
  %v704 = vpack.c.b16 %v686, %v685
  %v705 = vpack.c.b16 %v688, %v687
  %v706 = vpack.c.b16 %v690, %v689
  %723 = vmatpush.bf16.msra.mxu0 %v698
  %724 = vmatpush.bf16.msra.mxu0 %v697
  %725 = vmatpush.bf16.msra.mxu0 %v696
  %726 = vmatpush.bf16.msra.mxu0 %v695
  %727 = vmatpush.bf16.msra.mxu0 %v694
  %728 = vmatpush.bf16.msra.mxu0 %v693
  %729 = vmatpush.bf16.msra.mxu0 %v692
  %730 = vmatpush.bf16.msra.mxu0 %v691
  %731 = vmatmul.bf16.gmra.mxu0 %v153
  %v732 = vpop.f32.mrf.mxu0
  %v733 = vadd.f32 %v625, %v732
  %v734 = vpop.f32.mrf.mxu0
  %v735 = vadd.f32 %v625, %v734
  %736 = vmatmul.bf16.gmra.mxu0 %v154
  %v737 = vpop.f32.mrf.mxu0
  %v738 = vadd.f32 %v625, %v737
  %v739 = vpop.f32.mrf.mxu0
  %v740 = vadd.f32 %v625, %v739
  %741 = vmatmul.bf16.gmra.mxu0 %v155
  %v742 = vpop.f32.mrf.mxu0
  %v743 = vadd.f32 %v625, %v742
  %v744 = vpop.f32.mrf.mxu0
  %v745 = vadd.f32 %v625, %v744
  %746 = vmatmul.bf16.gmra.mxu0 %v156
  %v747 = vpop.f32.mrf.mxu0
  %v748 = vadd.f32 %v625, %v747
  %v749 = vpop.f32.mrf.mxu0
  %v750 = vadd.f32 %v625, %v749
  %751 = vmatmul.bf16.gmra.mxu0 %v157
  %v752 = vpop.f32.mrf.mxu0
  %v753 = vadd.f32 %v625, %v752
  %v754 = vpop.f32.mrf.mxu0
  %v755 = vadd.f32 %v625, %v754
  %756 = vmatmul.bf16.gmra.mxu0 %v158
  %v757 = vpop.f32.mrf.mxu0
  %v758 = vadd.f32 %v625, %v757
  %v759 = vpop.f32.mrf.mxu0
  %v760 = vadd.f32 %v625, %v759
  %761 = vmatmul.bf16.gmra.mxu0 %v159
  %v762 = vpop.f32.mrf.mxu0
  %v763 = vadd.f32 %v625, %v762
  %v764 = vpop.f32.mrf.mxu0
  %v765 = vadd.f32 %v625, %v764
  %766 = vmatmul.bf16.gmra.mxu0 %v160
  %v767 = vpop.f32.mrf.mxu0
  %v768 = vadd.f32 %v625, %v767
  %v769 = vpop.f32.mrf.mxu0
  %v770 = vadd.f32 %v625, %v769
  %771 = vmatmul.bf16.gmra.mxu0 %v161
  %v772 = vpop.f32.mrf.mxu0
  %v773 = vadd.f32 %v625, %v772
  %v774 = vpop.f32.mrf.mxu0
  %v775 = vadd.f32 %v625, %v774
  %776 = vmatmul.bf16.gmra.mxu0 %v162
  %v777 = vpop.f32.mrf.mxu0
  %v778 = vadd.f32 %v625, %v777
  %v779 = vpop.f32.mrf.mxu0
  %v780 = vadd.f32 %v625, %v779
  %781 = vmatmul.bf16.gmra.mxu0 %v163
  %v782 = vpop.f32.mrf.mxu0
  %v783 = vadd.f32 %v625, %v782
  %v784 = vpop.f32.mrf.mxu0
  %v785 = vadd.f32 %v625, %v784
  %786 = vmatmul.bf16.gmra.mxu0 %v164
  %v787 = vpop.f32.mrf.mxu0
  %v788 = vadd.f32 %v625, %v787
  %v789 = vpop.f32.mrf.mxu0
  %v790 = vadd.f32 %v625, %v789
  %791 = vmatmul.bf16.gmra.mxu0 %v165
  %v792 = vpop.f32.mrf.mxu0
  %v793 = vadd.f32 %v625, %v792
  %v794 = vpop.f32.mrf.mxu0
  %v795 = vadd.f32 %v625, %v794
  %796 = vmatmul.bf16.gmra.mxu0 %v166
  %v797 = vpop.f32.mrf.mxu0
  %v798 = vadd.f32 %v625, %v797
  %v799 = vpop.f32.mrf.mxu0
  %v800 = vadd.f32 %v625, %v799
  %801 = vmatmul.bf16.gmra.mxu0 %v167
  %v802 = vpop.f32.mrf.mxu0
  %v803 = vadd.f32 %v625, %v802
  %v804 = vpop.f32.mrf.mxu0
  %v805 = vadd.f32 %v625, %v804
  %806 = vmatmul.bf16.gmra.mxu0 %v168
  %v807 = vpop.f32.mrf.mxu0
  %v808 = vadd.f32 %v625, %v807
  %v809 = vpop.f32.mrf.mxu0
  %v810 = vadd.f32 %v625, %v809
  %811 = vdwg.mxu0
  %812 = vmatpush.bf16.msra.mxu0 %v706
  %813 = vmatpush.bf16.msra.mxu0 %v705
  %814 = vmatpush.bf16.msra.mxu0 %v704
  %815 = vmatpush.bf16.msra.mxu0 %v703
  %816 = vmatpush.bf16.msra.mxu0 %v702
  %817 = vmatpush.bf16.msra.mxu0 %v701
  %818 = vmatpush.bf16.msra.mxu0 %v700
  %819 = vmatpush.bf16.msra.mxu0 %v699
  %820 = vmatmul.bf16.gmra.mxu0 %v249
  %v821 = vpop.f32.mrf.mxu0
  %v822 = vadd.f32 %v733, %v821
  %v823 = vpop.f32.mrf.mxu0
  %v824 = vadd.f32 %v735, %v823
  %825 = vmatmul.bf16.gmra.mxu0 %v250
  %v826 = vpop.f32.mrf.mxu0
  %v827 = vadd.f32 %v738, %v826
  %v828 = vpop.f32.mrf.mxu0
  %v829 = vadd.f32 %v740, %v828
  %830 = vmatmul.bf16.gmra.mxu0 %v251
  %v831 = vpop.f32.mrf.mxu0
  %v832 = vadd.f32 %v743, %v831
  %v833 = vpop.f32.mrf.mxu0
  %v834 = vadd.f32 %v745, %v833
  %835 = vmatmul.bf16.gmra.mxu0 %v252
  %v836 = vpop.f32.mrf.mxu0
  %v837 = vadd.f32 %v748, %v836
  %v838 = vpop.f32.mrf.mxu0
  %v839 = vadd.f32 %v750, %v838
  %840 = vmatmul.bf16.gmra.mxu0 %v253
  %v841 = vpop.f32.mrf.mxu0
  %v842 = vadd.f32 %v753, %v841
  %v843 = vpop.f32.mrf.mxu0
  %v844 = vadd.f32 %v755, %v843
  %845 = vmatmul.bf16.gmra.mxu0 %v254
  %v846 = vpop.f32.mrf.mxu0
  %v847 = vadd.f32 %v758, %v846
  %v848 = vpop.f32.mrf.mxu0
  %v849 = vadd.f32 %v760, %v848
  %850 = vmatmul.bf16.gmra.mxu0 %v255
  %v851 = vpop.f32.mrf.mxu0
  %v852 = vadd.f32 %v763, %v851
  %v853 = vpop.f32.mrf.mxu0
  %v854 = vadd.f32 %v765, %v853
  %855 = vmatmul.bf16.gmra.mxu0 %v256
  %v856 = vpop.f32.mrf.mxu0
  %v857 = vadd.f32 %v768, %v856
  %v858 = vpop.f32.mrf.mxu0
  %v859 = vadd.f32 %v770, %v858
  %860 = vmatmul.bf16.gmra.mxu0 %v257
  %v861 = vpop.f32.mrf.mxu0
  %v862 = vadd.f32 %v773, %v861
  %v863 = vpop.f32.mrf.mxu0
  %v864 = vadd.f32 %v775, %v863
  %865 = vmatmul.bf16.gmra.mxu0 %v258
  %v866 = vpop.f32.mrf.mxu0
  %v867 = vadd.f32 %v778, %v866
  %v868 = vpop.f32.mrf.mxu0
  %v869 = vadd.f32 %v780, %v868
  %870 = vmatmul.bf16.gmra.mxu0 %v259
  %v871 = vpop.f32.mrf.mxu0
  %v872 = vadd.f32 %v783, %v871
  %v873 = vpop.f32.mrf.mxu0
  %v874 = vadd.f32 %v785, %v873
  %875 = vmatmul.bf16.gmra.mxu0 %v260
  %v876 = vpop.f32.mrf.mxu0
  %v877 = vadd.f32 %v788, %v876
  %v878 = vpop.f32.mrf.mxu0
  %v879 = vadd.f32 %v790, %v878
  %880 = vmatmul.bf16.gmra.mxu0 %v261
  %v881 = vpop.f32.mrf.mxu0
  %v882 = vadd.f32 %v793, %v881
  %v883 = vpop.f32.mrf.mxu0
  %v884 = vadd.f32 %v795, %v883
  %885 = vmatmul.bf16.gmra.mxu0 %v262
  %v886 = vpop.f32.mrf.mxu0
  %v887 = vadd.f32 %v798, %v886
  %v888 = vpop.f32.mrf.mxu0
  %v889 = vadd.f32 %v800, %v888
  %890 = vmatmul.bf16.gmra.mxu0 %v263
  %v891 = vpop.f32.mrf.mxu0
  %v892 = vadd.f32 %v803, %v891
  %v893 = vpop.f32.mrf.mxu0
  %v894 = vadd.f32 %v805, %v893
  %895 = vmatmul.bf16.gmra.mxu0 %v264
  %v896 = vpop.f32.mrf.mxu0
  %v897 = vadd.f32 %v808, %v896
  %v898 = vpop.f32.mrf.mxu0
  %v899 = vadd.f32 %v810, %v898
  %900 = vdwg.mxu0
  %v901 = vpack.c.bf16 %v512, %v512
  %v902 = vpack.c.bf16 %v514, %v514
  %v903 = vpack.c.bf16 %v517, %v517
  %v904 = vpack.c.bf16 %v519, %v519
  %v905 = vpack.c.bf16 %v522, %v522
  %v906 = vpack.c.bf16 %v524, %v524
  %v907 = vpack.c.bf16 %v527, %v527
  %v908 = vpack.c.bf16 %v529, %v529
  %v909 = vpack.c.bf16 %v532, %v532
  %v910 = vpack.c.bf16 %v534, %v534
  %v911 = vpack.c.bf16 %v537, %v537
  %v912 = vpack.c.bf16 %v539, %v539
  %v913 = vpack.c.bf16 %v542, %v542
  %v914 = vpack.c.bf16 %v544, %v544
  %v915 = vpack.c.bf16 %v547, %v547
  %v916 = vpack.c.bf16 %v549, %v549
  %v917 = vpack.c.bf16 %v552, %v552
  %v918 = vpack.c.bf16 %v554, %v554
  %v919 = vpack.c.bf16 %v557, %v557
  %v920 = vpack.c.bf16 %v559, %v559
  %v921 = vpack.c.bf16 %v562, %v562
  %v922 = vpack.c.bf16 %v564, %v564
  %v923 = vpack.c.bf16 %v567, %v567
  %v924 = vpack.c.bf16 %v569, %v569
  %v925 = vpack.c.bf16 %v572, %v572
  %v926 = vpack.c.bf16 %v574, %v574
  %v927 = vpack.c.bf16 %v577, %v577
  %v928 = vpack.c.bf16 %v579, %v579
  %v929 = vpack.c.bf16 %v582, %v582
  %v930 = vpack.c.bf16 %v584, %v584
  %v931 = vpack.c.bf16 %v587, %v587
  %v932 = vpack.c.bf16 %v589, %v589
  %vm933 = vcmask 814080
  %934 = vst.msk [vmem:[%s6] sm:$0xf] %vm933, %v901
  %935 = vst.msk [vmem:[%s6 + $0x4] sm:$0xf] %vm933, %v902
  %936 = vst.msk [vmem:[%s6 + $0x8] sm:$0xf] %vm933, %v903
  %937 = vst.msk [vmem:[%s6 + $0xc] sm:$0xf] %vm933, %v904
  %938 = vst.msk [vmem:[%s6 + $0x10] sm:$0xf] %vm933, %v905
  %939 = vst.msk [vmem:[%s6 + $0x14] sm:$0xf] %vm933, %v906
  %940 = vst.msk [vmem:[%s6 + $0x18] sm:$0xf] %vm933, %v907
  %941 = vst.msk [vmem:[%s6 + $0x1c] sm:$0xf] %vm933, %v908
  %942 = vst.msk [vmem:[%s6 + $0x20] sm:$0xf] %vm933, %v909
  %943 = vst.msk [vmem:[%s6 + $0x24] sm:$0xf] %vm933, %v910
  %944 = vst.msk [vmem:[%s6 + $0x28] sm:$0xf] %vm933, %v911
  %945 = vst.msk [vmem:[%s6 + $0x2c] sm:$0xf] %vm933, %v912
  %946 = vst.msk [vmem:[%s6 + $0x30] sm:$0xf] %vm933, %v913
  %947 = vst.msk [vmem:[%s6 + $0x34] sm:$0xf] %vm933, %v914
  %948 = vst.msk [vmem:[%s6 + $0x38] sm:$0xf] %vm933, %v915
  %949 = vst.msk [vmem:[%s6 + $0x3c] sm:$0xf] %vm933, %v916
  %950 = vst.msk [vmem:[%s6 + $0x40] sm:$0xf] %vm933, %v917
  %951 = vst.msk [vmem:[%s6 + $0x44] sm:$0xf] %vm933, %v918
  %952 = vst.msk [vmem:[%s6 + $0x48] sm:$0xf] %vm933, %v919
  %953 = vst.msk [vmem:[%s6 + $0x4c] sm:$0xf] %vm933, %v920
  %954 = vst.msk [vmem:[%s6 + $0x50] sm:$0xf] %vm933, %v921
  %955 = vst.msk [vmem:[%s6 + $0x54] sm:$0xf] %vm933, %v922
  %956 = vst.msk [vmem:[%s6 + $0x58] sm:$0xf] %vm933, %v923
  %957 = vst.msk [vmem:[%s6 + $0x5c] sm:$0xf] %vm933, %v924
  %958 = vst.msk [vmem:[%s6 + $0x60] sm:$0xf] %vm933, %v925
  %959 = vst.msk [vmem:[%s6 + $0x64] sm:$0xf] %vm933, %v926
  %960 = vst.msk [vmem:[%s6 + $0x68] sm:$0xf] %vm933, %v927
  %961 = vst.msk [vmem:[%s6 + $0x6c] sm:$0xf] %vm933, %v928
  %962 = vst.msk [vmem:[%s6 + $0x70] sm:$0xf] %vm933, %v929
  %963 = vst.msk [vmem:[%s6 + $0x74] sm:$0xf] %vm933, %v930
  %964 = vst.msk [vmem:[%s6 + $0x78] sm:$0xf] %vm933, %v931
  %965 = vst.msk [vmem:[%s6 + $0x7c] sm:$0xf] %vm933, %v932
  %v966 = vpack.c.bf16 %v822, %v822
  %v967 = vpack.c.bf16 %v824, %v824
  %v968 = vpack.c.bf16 %v827, %v827
  %v969 = vpack.c.bf16 %v829, %v829
  %v970 = vpack.c.bf16 %v832, %v832
  %v971 = vpack.c.bf16 %v834, %v834
  %v972 = vpack.c.bf16 %v837, %v837
  %v973 = vpack.c.bf16 %v839, %v839
  %v974 = vpack.c.bf16 %v842, %v842
  %v975 = vpack.c.bf16 %v844, %v844
  %v976 = vpack.c.bf16 %v847, %v847
  %v977 = vpack.c.bf16 %v849, %v849
  %v978 = vpack.c.bf16 %v852, %v852
  %v979 = vpack.c.bf16 %v854, %v854
  %v980 = vpack.c.bf16 %v857, %v857
  %v981 = vpack.c.bf16 %v859, %v859
  %v982 = vpack.c.bf16 %v862, %v862
  %v983 = vpack.c.bf16 %v864, %v864
  %v984 = vpack.c.bf16 %v867, %v867
  %v985 = vpack.c.bf16 %v869, %v869
  %v986 = vpack.c.bf16 %v872, %v872
  %v987 = vpack.c.bf16 %v874, %v874
  %v988 = vpack.c.bf16 %v877, %v877
  %v989 = vpack.c.bf16 %v879, %v879
  %v990 = vpack.c.bf16 %v882, %v882
  %v991 = vpack.c.bf16 %v884, %v884
  %v992 = vpack.c.bf16 %v887, %v887
  %v993 = vpack.c.bf16 %v889, %v889
  %v994 = vpack.c.bf16 %v892, %v892
  %v995 = vpack.c.bf16 %v894, %v894
  %v996 = vpack.c.bf16 %v897, %v897
  %v997 = vpack.c.bf16 %v899, %v899
  %998 = vst.msk [vmem:[%s7] sm:$0xf] %vm933, %v966
  %999 = vst.msk [vmem:[%s7 + $0x4] sm:$0xf] %vm933, %v967
  %1000 = vst.msk [vmem:[%s7 + $0x8] sm:$0xf] %vm933, %v968
  %1001 = vst.msk [vmem:[%s7 + $0xc] sm:$0xf] %vm933, %v969
  %1002 = vst.msk [vmem:[%s7 + $0x10] sm:$0xf] %vm933, %v970
  %1003 = vst.msk [vmem:[%s7 + $0x14] sm:$0xf] %vm933, %v971
  %1004 = vst.msk [vmem:[%s7 + $0x18] sm:$0xf] %vm933, %v972
  %1005 = vst.msk [vmem:[%s7 + $0x1c] sm:$0xf] %vm933, %v973
  %1006 = vst.msk [vmem:[%s7 + $0x20] sm:$0xf] %vm933, %v974
  %1007 = vst.msk [vmem:[%s7 + $0x24] sm:$0xf] %vm933, %v975
  %1008 = vst.msk [vmem:[%s7 + $0x28] sm:$0xf] %vm933, %v976
  %1009 = vst.msk [vmem:[%s7 + $0x2c] sm:$0xf] %vm933, %v977
  %1010 = vst.msk [vmem:[%s7 + $0x30] sm:$0xf] %vm933, %v978
  %1011 = vst.msk [vmem:[%s7 + $0x34] sm:$0xf] %vm933, %v979
  %1012 = vst.msk [vmem:[%s7 + $0x38] sm:$0xf] %vm933, %v980
  %1013 = vst.msk [vmem:[%s7 + $0x3c] sm:$0xf] %vm933, %v981
  %1014 = vst.msk [vmem:[%s7 + $0x40] sm:$0xf] %vm933, %v982
  %1015 = vst.msk [vmem:[%s7 + $0x44] sm:$0xf] %vm933, %v983
  %1016 = vst.msk [vmem:[%s7 + $0x48] sm:$0xf] %vm933, %v984
  %1017 = vst.msk [vmem:[%s7 + $0x4c] sm:$0xf] %vm933, %v985
  %1018 = vst.msk [vmem:[%s7 + $0x50] sm:$0xf] %vm933, %v986
  %1019 = vst.msk [vmem:[%s7 + $0x54] sm:$0xf] %vm933, %v987
  %1020 = vst.msk [vmem:[%s7 + $0x58] sm:$0xf] %vm933, %v988
  %1021 = vst.msk [vmem:[%s7 + $0x5c] sm:$0xf] %vm933, %v989
  %1022 = vst.msk [vmem:[%s7 + $0x60] sm:$0xf] %vm933, %v990
  %1023 = vst.msk [vmem:[%s7 + $0x64] sm:$0xf] %vm933, %v991
  %1024 = vst.msk [vmem:[%s7 + $0x68] sm:$0xf] %vm933, %v992
  %1025 = vst.msk [vmem:[%s7 + $0x6c] sm:$0xf] %vm933, %v993
  %1026 = vst.msk [vmem:[%s7 + $0x70] sm:$0xf] %vm933, %v994
  %1027 = vst.msk [vmem:[%s7 + $0x74] sm:$0xf] %vm933, %v995
  %1028 = vst.msk [vmem:[%s7 + $0x78] sm:$0xf] %vm933, %v996
  %1029 = vst.msk [vmem:[%s7 + $0x7c] sm:$0xf] %vm933, %v997
  // Predicated region
  $region26: #{_fused_forward.1} parent=0 // pred_check
    _
  $region27: #{_fused_forward.1} parent=0 // pred_check_branch
    %1031 = sbr.rel (0) target = $region29
  $region28: #{_fused_forward.1} parent=0 // pred_region
    _
  $region29: #{_fused_forward.1} parent=0 // pred_fallthru
    _
  // Predicated region
  $region30: #{_fused_forward.1} parent=0 // pred_check
    _
  $region31: #{_fused_forward.1} parent=0 // pred_check_branch
    %1033 = sbr.rel (0) target = $region33
  $region32: #{_fused_forward.1} parent=0 // pred_region
    _
  $region33: #{_fused_forward.1} parent=0 // pred_fallthru
    _
  // Predicated region
  $region34: #{_fused_forward.1} parent=0 // pred_check
    _
  $region35: #{_fused_forward.1} parent=0 // pred_check_branch
    %1035 = sbr.rel (0) target = $region37
  $region36: #{_fused_forward.1} parent=0 // pred_region
    _
  $region37: #{_fused_forward.1} parent=0 // pred_fallthru
    _
  // Predicated region
  $region38: #{_fused_forward.1} parent=0 // pred_check
    _
  $region39: #{_fused_forward.1} parent=0 // pred_check_branch
    %1037 = sbr.rel (0) target = $region41
  $region40: #{_fused_forward.1} parent=0 // pred_region
    _
  $region41: #{_fused_forward.1} parent=0 // pred_fallthru
    _

</llo_original>
